<compile_context>
chip_gen: v6e
topology: v6e:2x2x1
jax: 0.10.0
libtpu: 0.0.40
codegen_flags: <defaults>
</compile_context>

<pallas_src>
import jax
import jax.numpy as jnp
from jax.experimental import pallas as pl
from jax.experimental.pallas import tpu as pltpu


def _cdiv(a, b):
    return (a + b - 1) // b


def _round_up(a, b):
    return _cdiv(a, b) * b


def _chip_defaults():
    """(num_parallel, scoped-VMEM-limit) heuristics per chip generation."""
    num_parallel = 1
    vmem_phys = 128 * 1024 * 1024            # v5e / v6e physical VMEM
    try:
        kind = jax.devices()[0].device_kind.lower()
        if "v7" in kind:                     # 2 TensorCores, 64 MiB VMEM per TC
            num_parallel = 2
            vmem_phys = 64 * 1024 * 1024
        elif "v2" in kind or "v3" in kind:   # older chips: small VMEM, stay safe
            vmem_phys = 16 * 1024 * 1024
    except Exception:
        pass
    try:
        vmem_phys = min(vmem_phys, int(pltpu.get_tpu_info().vmem_capacity_bytes))
    except Exception:
        pass
    vmem_limit = max(16 * 1024 * 1024, min(vmem_phys * 3 // 4, 96 * 1024 * 1024))
    return num_parallel, vmem_limit


def _make_packed_kernel(others_idx, n_classes, samples_per_row):
    """Lane-dense path: each 128-lane row holds G = 128//C samples."""
    oi, G = others_idx, samples_per_row

    def kernel(x_ref, t_ref, seg_ref, sel_ref, out_ref, fpe_acc, fne_acc):
        j = pl.program_id(1)

        @pl.when(j == 0)
        def _init():
            fpe_acc[...] = jnp.zeros_like(fpe_acc)
            fne_acc[...] = jnp.zeros_like(fne_acc)

        x = x_ref[...].astype(jnp.float32)      # (tr, 128)
        t = t_ref[...]                          # (tr, G) int32, -1 => padded/invalid

        # Shared row max across the G packed samples is a valid stability shift
        # (every lane of a segment gets the same constant subtracted).
        m = jnp.max(x, axis=-1, keepdims=True)
        e = jnp.exp(x - m)                      # <= 1, no overflow

        # MXU does the segmented reductions (idle otherwise):
        #   seg: block-diagonal ones -> per-sample sum(exp) in column g
        #   sel: one-hot at lane g*C+others_idx -> per-sample exp at others_idx
        d_full = jnp.dot(e, seg_ref[...], preferred_element_type=jnp.float32)
        s_full = jnp.dot(e, sel_ref[...], preferred_element_type=jnp.float32)
        denom = d_full[:, :G]
        e_o = s_full[:, :G]
        # exact reciprocal (approx=True is a further EUP micro-opt if tolerance allows)
        p_o = e_o * pl.reciprocal(denom, approx=False)

        is_fne = t == oi
        is_fpe = jnp.logical_and(t >= 0, t != oi)

        zero = jnp.zeros_like(p_o)
        fne_acc[...] += jnp.where(is_fne, (1.0 - p_o) ** 2, zero)   # == 0.5*((1-p)^2+(p-1)^2)
        fpe_acc[...] += jnp.where(is_fpe, p_o ** 2, zero)           # == 0.5*((-p)^2+p^2)

        @pl.when(j == pl.num_programs(1) - 1)
        def _finalize():
            lane = jax.lax.broadcasted_iota(jnp.int32, (1, 1, 2), 2)
            out_ref[...] = jnp.where(lane == 0,
                                     jnp.sum(fpe_acc[...]),
                                     jnp.sum(fne_acc[...]))

    return kernel


def _make_rowmajor_kernel(others_idx):
    """Fallback path: natural (B, C) layout (C >= 128, or B not packable)."""
    oi = others_idx

    def kernel(x_ref, t_ref, out_ref, fpe_acc, fne_acc):
        j = pl.program_id(1)

        @pl.when(j == 0)
        def _init():
            fpe_acc[...] = jnp.zeros_like(fpe_acc)
            fne_acc[...] = jnp.zeros_like(fne_acc)

        x = x_ref[...].astype(jnp.float32)      # (tr, C)
        t = t_ref[...]                          # (tr, 1) int32, -1 => padded/invalid

        m = jnp.max(x, axis=-1, keepdims=True)
        e = jnp.exp(x - m)
        denom = jnp.sum(e, axis=-1, keepdims=True)
        e_o = e[:, oi:oi + 1]                   # static column slice (others_idx is Python int)
        p_o = e_o * pl.reciprocal(denom, approx=False)

        is_fne = t == oi
        is_fpe = jnp.logical_and(t >= 0, t != oi)

        zero = jnp.zeros_like(p_o)
        fne_acc[...] += jnp.where(is_fne, (1.0 - p_o) ** 2, zero)
        fpe_acc[...] += jnp.where(is_fpe, p_o ** 2, zero)

        @pl.when(j == pl.num_programs(1) - 1)
        def _finalize():
            lane = jax.lax.broadcasted_iota(jnp.int32, (1, 1, 2), 2)
            out_ref[...] = jnp.where(lane == 0,
                                     jnp.sum(fpe_acc[...]),
                                     jnp.sum(fne_acc[...]))

    return kernel


def amfe_loss(preds, target, alpha, others_idx, *,
              tile_rows=None, num_parallel=None, vmem_limit_bytes=None):
    """preds: (B, C) float; target: (B,) int; alpha: python float; others_idx: python int.
    Returns the scalar AMFE loss (float32).  NaN if a group is empty (same as reference)."""
    B, C = preds.shape
    oi = int(others_idx)
    target = target.astype(jnp.int32)

    # Group counts in plain JAX (reads B int32s, negligible) -> no count accumulators.
    fne_cnt = jnp.sum((target == oi).astype(jnp.float32))
    fpe_cnt = jnp.float32(B) - fne_cnt

    default_parallel, default_vmem = _chip_defaults()
    if num_parallel is None:
        num_parallel = default_parallel
    if vmem_limit_bytes is None:
        vmem_limit_bytes = default_vmem

    itemsize = jnp.dtype(preds.dtype).itemsize
    packed = (C < 128) and (128 % C == 0) and (B % (128 // C) == 0)

    if packed:
        G = 128 // C
        n_rows = B // G
        x = preds.reshape(n_rows, 128)          # free row-major reshape, no data movement
        t = target.reshape(n_rows, G)
        # per packed row: 2x preds buf + 2x target buf (lane padded) + 2 f32 accumulators
        row_bytes = 2 * 128 * itemsize + 2 * 128 * 4 + 2 * 128 * 4
    else:
        G = None
        n_rows = B
        x = preds
        t = target.reshape(B, 1)
        c_pad = _round_up(C, 128)               # lane padding of the VMEM tile
        row_bytes = 2 * c_pad * itemsize + 2 * 128 * 4 + 2 * 128 * 4

    # Tile sizing: biggest row tile whose working set fits ~70% of the scoped VMEM
    # limit (double-buffered inputs + persistent accumulators), leaving headroom.
    if tile_rows is None:
        budget = int(vmem_limit_bytes * 0.7) - (1 << 20)
        tile_rows = max(8, (budget // row_bytes) // 8 * 8)
    tile_rows = max(8, (int(tile_rows) // 8) * 8)
    tile_rows = min(tile_rows, _round_up(n_rows, 8))

    blocks_needed = _cdiv(n_rows, tile_rows)
    num_parallel = max(1, min(int(num_parallel), blocks_needed))
    blocks_per_chunk = _cdiv(blocks_needed, num_parallel)
    total_rows = num_parallel * blocks_per_chunk * tile_rows
    last_block = blocks_needed - 1

    # Only the tiny target array is padded (sentinel -1 marks invalid rows); preds is
    # consumed unpadded via the clamped cdiv grid + in-kernel sentinel mask.
    if total_rows != n_rows:
        t = jnp.pad(t, ((0, total_rows - n_rows), (0, 0)), constant_values=-1)

    def x_map(p, j):
        return (jnp.minimum(p * blocks_per_chunk + j, last_block), 0)

    def t_map(p, j):
        return (p * blocks_per_chunk + j, 0)

    if packed:
        # Constant MXU matrices: block-diagonal segment-sum and one-hot "others" selector.
        lane_i = jax.lax.broadcasted_iota(jnp.int32, (128, 128), 0)
        col_g = jax.lax.broadcasted_iota(jnp.int32, (128, 128), 1)
        seg = (lane_i // C == col_g).astype(jnp.float32)
        sel = (lane_i == col_g * C + oi).astype(jnp.float32)

        kernel = _make_packed_kernel(oi, C, G)
        in_specs = [
            pl.BlockSpec((tile_rows, 128), x_map),
            pl.BlockSpec((tile_rows, G), t_map),
            pl.BlockSpec((128, 128), lambda p, j: (0, 0)),   # constant block, DMA'd once
            pl.BlockSpec((128, 128), lambda p, j: (0, 0)),
        ]
        operands = (x, t, seg, sel)
        acc_shape = (tile_rows, G)
    else:
        kernel = _make_rowmajor_kernel(oi)
        in_specs = [
            pl.BlockSpec((tile_rows, C), x_map),
            pl.BlockSpec((tile_rows, 1), t_map),
        ]
        operands = (x, t)
        acc_shape = (tile_rows, 1)

    partials = pl.pallas_call(
        kernel,
        out_shape=jax.ShapeDtypeStruct((num_parallel, 1, 2), jnp.float32),
        grid_spec=pltpu.PrefetchScalarGridSpec(
            num_scalar_prefetch=0,
            grid=(num_parallel, blocks_per_chunk),
            in_specs=in_specs,
            out_specs=pl.BlockSpec((1, 1, 2), lambda p, j: (p, 0, 0)),
            scratch_shapes=[pltpu.VMEM(acc_shape, jnp.float32)] * 2,
        ),
        compiler_params=pltpu.CompilerParams(
            dimension_semantics=("parallel", "arbitrary"),
            vmem_limit_bytes=int(vmem_limit_bytes),
        ),
    )(*operands)

    # tiny final combine in plain JAX: per-chunk partials are [fpe_sum, fne_sum]
    sums = jnp.sum(partials.reshape(num_parallel, 2), axis=0)
    fpe = sums[0] / fpe_cnt
    fne = sums[1] / fne_cnt
    return (1.0 - alpha) * fpe + alpha * fne


def _reference(preds, target, alpha, others_idx):
    """Vectorized transcription of the PyTorch AMFELoss forward."""
    p = jax.nn.softmax(preds.astype(jnp.float32), axis=1)
    p_o = p[:, others_idx]
    row_sum = jnp.sum(p, axis=1)
    is_o = target == others_idx
    fne_i = 0.5 * ((row_sum - p_o) ** 2 + (p_o - 1.0) ** 2)
    fpe_i = 0.5 * ((-p_o) ** 2 + p_o ** 2)
    fne = jnp.sum(jnp.where(is_o, fne_i, 0.0)) / jnp.sum(is_o)
    fpe = jnp.sum(jnp.where(~is_o, fpe_i, 0.0)) / jnp.sum(~is_o)
    return (1.0 - alpha) * fpe + alpha * fne


if __name__ == "__main__":
    key = jax.random.PRNGKey(0)
    alpha = 0.25
    others_idx = 3

    def run_case(batch, n_classes, **kw):
        k1, k2 = jax.random.split(jax.random.fold_in(key, batch * 1000 + n_classes))
        preds = jax.random.normal(k1, (batch, n_classes), dtype=jnp.float32)
        target = jax.random.randint(k2, (batch,), 0, n_classes, dtype=jnp.int32)
        # guarantee both branches ('others' and 'non-others') are populated
        target = target.at[0].set(others_idx)
        target = target.at[1].set((others_idx + 1) % n_classes)
        loss = jax.block_until_ready(amfe_loss(preds, target, alpha, others_idx, **kw))
        ref = _reference(preds, target, alpha, others_idx)
        assert jnp.allclose(loss, ref, rtol=1e-4, atol=1e-6), (batch, n_classes, loss, ref)

    # lane-packed fast path (C=8 -> 16 samples per 128-lane row), ragged grid, 2 chunks
    run_case(160, 8, tile_rows=8, num_parallel=2)
    # row-major fallback (B not a multiple of 128//C), ragged last block + sentinel mask
    run_case(100, 8, tile_rows=32, num_parallel=2)
    # wide-class fallback (C >= 128), auto tile / VMEM sizing
    run_case(64, 130)

    print("KERNEL_OK")
</pallas_src>

<mosaic_0001>
module attributes {stable_mosaic.version = 11 : i64} {
  func.func @kernel(%arg0: i32, %arg1: i32, %arg2: memref<8x128xf32, #tpu.memory_space<vmem>>, %arg3: memref<8x16xi32, #tpu.memory_space<vmem>>, %arg4: memref<128x128xf32, #tpu.memory_space<vmem>>, %arg5: memref<128x128xf32, #tpu.memory_space<vmem>>, %arg6: memref<1x1x2xf32, #tpu.memory_space<vmem>>, %arg7: memref<8x16xf32, #tpu.memory_space<vmem>>, %arg8: memref<8x16xf32, #tpu.memory_space<vmem>>) attributes {dimension_semantics = [#tpu.dimension_semantics<parallel>, #tpu.dimension_semantics<arbitrary>], iteration_bounds = array<i64: 2, 1>, scalar_prefetch = 0 : i64, scratch_operands = 2 : i64, tpu.core_type = #tpu.core_type<tc>, window_params = [{transform_indices = @transform_0, window_bounds = array<i64: 8, 128>}, {transform_indices = @transform_1, window_bounds = array<i64: 8, 16>}, {pipeline_mode = #tpu.pipeline_mode<synchronous>, transform_indices = @transform_2, window_bounds = array<i64: 128, 128>}, {pipeline_mode = #tpu.pipeline_mode<synchronous>, transform_indices = @transform_3, window_bounds = array<i64: 128, 128>}, {transform_indices = @transform_4, window_bounds = array<i64: 1, 1, 2>}]} {
    %c0_i32 = arith.constant 0 : i32
    %0 = arith.cmpi eq, %arg1, %c0_i32 : i32
    %1 = arith.extui %0 : i1 to i32
    %c0_i32_0 = arith.constant 0 : i32
    %2 = arith.cmpi ne, %1, %c0_i32_0 : i32
    scf.if %2 {
      %cst_24 = arith.constant 0.000000e+00 : f32
      %41 = vector.broadcast %cst_24 : f32 to vector<8x16xf32>
      %c0_25 = arith.constant 0 : index
      %c0_26 = arith.constant 0 : index
      %42 = vector.load %arg7[%c0_25, %c0_26] : memref<8x16xf32, #tpu.memory_space<vmem>>, vector<8x16xf32>
      tpu.vector_store %arg7[%c0_25, %c0_26], %41 {strides = array<i32>} : memref<8x16xf32, #tpu.memory_space<vmem>>, vector<8x16xf32>,
      %cst_27 = arith.constant 0.000000e+00 : f32
      %43 = vector.broadcast %cst_27 : f32 to vector<8x16xf32>
      %c0_28 = arith.constant 0 : index
      %c0_29 = arith.constant 0 : index
      %44 = vector.load %arg8[%c0_28, %c0_29] : memref<8x16xf32, #tpu.memory_space<vmem>>, vector<8x16xf32>
      tpu.vector_store %arg8[%c0_28, %c0_29], %43 {strides = array<i32>} : memref<8x16xf32, #tpu.memory_space<vmem>>, vector<8x16xf32>,
    } else {
    }
    %c0 = arith.constant 0 : index
    %c0_1 = arith.constant 0 : index
    %3 = vector.load %arg2[%c0, %c0_1] : memref<8x128xf32, #tpu.memory_space<vmem>>, vector<8x128xf32>
    %c0_2 = arith.constant 0 : index
    %c0_3 = arith.constant 0 : index
    %4 = vector.load %arg3[%c0_2, %c0_3] : memref<8x16xi32, #tpu.memory_space<vmem>>, vector<8x16xi32>
    %cst = arith.constant dense<0xFF800000> : vector<8xf32>
    %5 = vector.multi_reduction <maximumf>, %3, %cst [1] : vector<8x128xf32> to vector<8xf32>
    %6 = vector.shape_cast %5 : vector<8xf32> to vector<8x1xf32>
    %7 = vector.broadcast %6 : vector<8x1xf32> to vector<8x128xf32>
    %8 = arith.subf %3, %7 : vector<8x128xf32>
    %9 = math.exp %8 : vector<8x128xf32>
    %c0_4 = arith.constant 0 : index
    %c0_5 = arith.constant 0 : index
    %10 = vector.load %arg4[%c0_4, %c0_5] : memref<128x128xf32, #tpu.memory_space<vmem>>, vector<128x128xf32>
    %cst_6 = arith.constant dense<0.000000e+00> : vector<8x128xf32>
    %11 = tpu.matmul %9, %10, %cst_6 {dimension_numbers = #tpu.dot_dimension_numbers<[1], [0], [0], [1], [0, 0, 1, 1], [], []>} : vector<8x128xf32>, vector<128x128xf32>, vector<8x128xf32> -> vector<8x128xf32>
    %c0_7 = arith.constant 0 : index
    %c0_8 = arith.constant 0 : index
    %12 = vector.load %arg5[%c0_7, %c0_8] : memref<128x128xf32, #tpu.memory_space<vmem>>, vector<128x128xf32>
    %cst_9 = arith.constant dense<0.000000e+00> : vector<8x128xf32>
    %13 = tpu.matmul %9, %12, %cst_9 {dimension_numbers = #tpu.dot_dimension_numbers<[1], [0], [0], [1], [0, 0, 1, 1], [], []>} : vector<8x128xf32>, vector<128x128xf32>, vector<8x128xf32> -> vector<8x128xf32>
    %14 = vector.extract_strided_slice %11 {offsets = [0, 0], sizes = [8, 16], strides = [1, 1]} : vector<8x128xf32> to vector<8x16xf32>
    %15 = vector.extract_strided_slice %13 {offsets = [0, 0], sizes = [8, 16], strides = [1, 1]} : vector<8x128xf32> to vector<8x16xf32>
    %16 = tpu.reciprocal %14 : vector<8x16xf32> -> vector<8x16xf32>
    %17 = arith.mulf %15, %16 : vector<8x16xf32>
    %c3_i32 = arith.constant 3 : i32
    %18 = vector.broadcast %c3_i32 : i32 to vector<8x16xi32>
    %19 = arith.cmpi eq, %4, %18 : vector<8x16xi32>
    %c0_i32_10 = arith.constant 0 : i32
    %20 = vector.broadcast %c0_i32_10 : i32 to vector<8x16xi32>
    %21 = arith.cmpi sge, %4, %20 : vector<8x16xi32>
    %c3_i32_11 = arith.constant 3 : i32
    %22 = vector.broadcast %c3_i32_11 : i32 to vector<8x16xi32>
    %23 = arith.cmpi ne, %4, %22 : vector<8x16xi32>
    %24 = arith.andi %21, %23 : vector<8x16xi1>
    %cst_12 = arith.constant 0.000000e+00 : f32
    %25 = vector.broadcast %cst_12 : f32 to vector<8x16xf32>
    %c0_13 = arith.constant 0 : index
    %c0_14 = arith.constant 0 : index
    %26 = vector.load %arg8[%c0_13, %c0_14] : memref<8x16xf32, #tpu.memory_space<vmem>>, vector<8x16xf32>
    %cst_15 = arith.constant 1.000000e+00 : f32
    %27 = vector.broadcast %cst_15 : f32 to vector<8x16xf32>
    %28 = arith.subf %27, %17 : vector<8x16xf32>
    %29 = arith.mulf %28, %28 : vector<8x16xf32>
    %30 = arith.select %19, %29, %25 : vector<8x16xi1>, vector<8x16xf32>
    %31 = arith.addf %26, %30 : vector<8x16xf32>
    %c0_16 = arith.constant 0 : index
    %c0_17 = arith.constant 0 : index
    %32 = vector.load %arg8[%c0_16, %c0_17] : memref<8x16xf32, #tpu.memory_space<vmem>>, vector<8x16xf32>
    tpu.vector_store %arg8[%c0_16, %c0_17], %31 {strides = array<i32>} : memref<8x16xf32, #tpu.memory_space<vmem>>, vector<8x16xf32>,
    %c0_18 = arith.constant 0 : index
    %c0_19 = arith.constant 0 : index
    %33 = vector.load %arg7[%c0_18, %c0_19] : memref<8x16xf32, #tpu.memory_space<vmem>>, vector<8x16xf32>
    %34 = arith.mulf %17, %17 : vector<8x16xf32>
    %35 = arith.select %24, %34, %25 : vector<8x16xi1>, vector<8x16xf32>
    %36 = arith.addf %33, %35 : vector<8x16xf32>
    %c0_20 = arith.constant 0 : index
    %c0_21 = arith.constant 0 : index
    %37 = vector.load %arg7[%c0_20, %c0_21] : memref<8x16xf32, #tpu.memory_space<vmem>>, vector<8x16xf32>
    tpu.vector_store %arg7[%c0_20, %c0_21], %36 {strides = array<i32>} : memref<8x16xf32, #tpu.memory_space<vmem>>, vector<8x16xf32>,
    %c0_i32_22 = arith.constant 0 : i32
    %38 = arith.cmpi eq, %arg1, %c0_i32_22 : i32
    %39 = arith.extui %38 : i1 to i32
    %c0_i32_23 = arith.constant 0 : i32
    %40 = arith.cmpi ne, %39, %c0_i32_23 : i32
    scf.if %40 {
      %41 = tpu.iota {dimensions = array<i32: 2>} : vector<1x1x2xi32>
      %c0_i32_24 = arith.constant 0 : i32
      %42 = vector.broadcast %c0_i32_24 : i32 to vector<1x1x2xi32>
      %43 = arith.cmpi eq, %41, %42 : vector<1x1x2xi32>
      %c0_25 = arith.constant 0 : index
      %c0_26 = arith.constant 0 : index
      %44 = vector.load %arg7[%c0_25, %c0_26] : memref<8x16xf32, #tpu.memory_space<vmem>>, vector<8x16xf32>
      %45 = vector.shape_cast %44 : vector<8x16xf32> to vector<1x8x16xf32>
      %cst_27 = arith.constant dense<0.000000e+00> : vector<1xf32>
      %46 = vector.multi_reduction <add>, %45, %cst_27 [1, 2] : vector<1x8x16xf32> to vector<1xf32>
      %47 = vector.shape_cast %46 : vector<1xf32> to vector<1x1x1xf32>
      %48 = vector.extract %47[0, 0, 0] : f32 from vector<1x1x1xf32>
      %c0_28 = arith.constant 0 : index
      %c0_29 = arith.constant 0 : index
      %49 = vector.load %arg8[%c0_28, %c0_29] : memref<8x16xf32, #tpu.memory_space<vmem>>, vector<8x16xf32>
      %50 = vector.shape_cast %49 : vector<8x16xf32> to vector<1x8x16xf32>
      %cst_30 = arith.constant dense<0.000000e+00> : vector<1xf32>
      %51 = vector.multi_reduction <add>, %50, %cst_30 [1, 2] : vector<1x8x16xf32> to vector<1xf32>
      %52 = vector.shape_cast %51 : vector<1xf32> to vector<1x1x1xf32>
      %53 = vector.extract %52[0, 0, 0] : f32 from vector<1x1x1xf32>
      %54 = vector.broadcast %48 : f32 to vector<1x1x2xf32>
      %55 = vector.broadcast %53 : f32 to vector<1x1x2xf32>
      %56 = arith.select %43, %54, %55 : vector<1x1x2xi1>, vector<1x1x2xf32>
      %c0_31 = arith.constant 0 : index
      %c0_32 = arith.constant 0 : index
      %c0_33 = arith.constant 0 : index
      %57 = vector.load %arg6[%c0_31, %c0_32, %c0_33] : memref<1x1x2xf32, #tpu.memory_space<vmem>>, vector<1x1x2xf32>
      tpu.vector_store %arg6[%c0_31, %c0_32, %c0_33], %56 {strides = array<i32>} : memref<1x1x2xf32, #tpu.memory_space<vmem>>, vector<1x1x2xf32>,
    } else {
    }
    return
  }
  func.func @transform_0(%arg0: i32, %arg1: i32) -> (i32, i32) {
    %c1_i32 = arith.constant 1 : i32
    %0 = arith.muli %arg0, %c1_i32 : i32
    %1 = arith.addi %0, %arg1 : i32
    %c1_i32_0 = arith.constant 1 : i32
    %2 = arith.minsi %1, %c1_i32_0 : i32
    %c0_i32 = arith.constant 0 : i32
    %c0_i32_1 = arith.constant 0 : i32
    return %2, %c0_i32 : i32, i32
  }
  func.func @transform_1(%arg0: i32, %arg1: i32) -> (i32, i32) {
    %c1_i32 = arith.constant 1 : i32
    %0 = arith.muli %arg0, %c1_i32 : i32
    %1 = arith.addi %0, %arg1 : i32
    %c0_i32 = arith.constant 0 : i32
    %c0_i32_0 = arith.constant 0 : i32
    return %1, %c0_i32 : i32, i32
  }
  func.func @transform_2(%arg0: i32, %arg1: i32) -> (i32, i32) {
    %c0_i32 = arith.constant 0 : i32
    %c0_i32_0 = arith.constant 0 : i32
    %c0_i32_1 = arith.constant 0 : i32
    return %c0_i32, %c0_i32_0 : i32, i32
  }
  func.func @transform_3(%arg0: i32, %arg1: i32) -> (i32, i32) {
    %c0_i32 = arith.constant 0 : i32
    %c0_i32_0 = arith.constant 0 : i32
    %c0_i32_1 = arith.constant 0 : i32
    return %c0_i32, %c0_i32_0 : i32, i32
  }
  func.func @transform_4(%arg0: i32, %arg1: i32) -> (i32, i32, i32) {
    %c0_i32 = arith.constant 0 : i32
    %c0_i32_0 = arith.constant 0 : i32
    %c0_i32_1 = arith.constant 0 : i32
    return %arg0, %c0_i32, %c0_i32_0 : i32, i32, i32
  }
}

</mosaic_0001>

<llo_original>
// kernel: tpu_custom_call.1
$region0: #{tpu_custom_call.1}
  #allocation0 [shape = 'u32[]', space=smem, size = 0x4, offset = 0x4, fixed_abs, tag = 'smem constant byte address 0x4 - core index']
  #allocation1 [shape = 'u32[144,128]{1,0:T(1,128)}', space=vmem, size = 0x12000, scoped, tag = 'internal scratch']
  #allocation2 [shape = 'f32[8,16]{1,0:T(8,128)}', space=vmem, size = 0x1000, scoped, tag = 'scratch operand']
  #allocation3 [shape = 'f32[8,16]{1,0:T(8,128)}', space=vmem, size = 0x1000, scoped, tag = 'scratch operand']
  %s0 = inlined_call_operand.hbm [shape: f32[10,128], index: 0, kind: input, shape index: {}]
  %s1 = inlined_call_operand.hbm [shape: s32[16,16], index: 1, kind: input, shape index: {}]
  %s2 = inlined_call_operand.hbm [shape: f32[128,128], index: 2, kind: input, shape index: {}]
  %s3 = inlined_call_operand.hbm [shape: f32[128,128], index: 3, kind: input, shape index: {}]
  %s4 = inlined_call_operand.hbm [shape: f32[2,1,2], index: 4, kind: output, shape index: {}]
  %s5 = sld [smem:[#allocation0]]
  $region73: #{tpu_custom_call.1} parent=0
    _
  %s7 = ssub.s32 1, %s5
  %s8 = scalar_select 0, %s7, %s5
  $region1: #{tpu_custom_call.1} parent=0
    #allocation4 [shape = 'u8[8192]{0}', space=vmem, size = 0x2000, scoped, tag = 'input window, operand 0']
    #allocation5 [shape = 's32[2]{0}', space=sflag, size = 0x8, scoped, tag = 'scoped memory for tpu_custom_call.1']
    #allocation6 [shape = 's32[2]{0}', space=sflag, size = 0x8, scoped, tag = 'scoped memory for tpu_custom_call.1']
    #allocation7 [shape = 'u8[8192]{0}', space=vmem, size = 0x2000, scoped, tag = 'input window, operand 1']
    #allocation8 [shape = 's32[2]{0}', space=sflag, size = 0x8, scoped, tag = 'scoped memory for tpu_custom_call.1']
    #allocation9 [shape = 'u8[65536]{0}', space=vmem, size = 0x10000, scoped, tag = 'input window, operand 2, single buffered']
    #allocation10 [shape = 'u8[65536]{0}', space=vmem, size = 0x10000, scoped, tag = 'input window, operand 3, single buffered']
    #allocation11 [shape = 's32[1]{0}', space=sflag, size = 0x4, scoped, tag = 'scoped memory for tpu_custom_call.1']
    #allocation12 [shape = 'u8[1024]{0}', space=vmem, size = 0x400, scoped, tag = 'output window, operand 0']
    %9 = vsyncpa [#allocation5], 0
    %s10 = scalar_lea.sflag [#allocation5], 1
    %11 = vsyncpa %s10, 0
    %12 = vsyncpa [#allocation8], 0
    %s13 = scalar_lea.sflag [#allocation8], 1
    %14 = vsyncpa %s13, 0
    %15 = vsyncpa [#allocation11], 0
    %16 = vsyncpa [#allocation6], 0
    %s17 = scalar_lea.sflag [#allocation6], 1
    %18 = vsyncpa %s17, 0
    loop: start=0, step=1, limit=4
    $region2: #{tpu_custom_call.1} parent=1 // loop_pre_header
      _
    $region3: #{tpu_custom_call.1} parent=1 // loop_header
      %s20 = sphi 0, %s24
      %p21 = scmp.ge.s32.totalorder %s20, 4
      %s27 = sphi 0, %s39
      %s28 = sphi 0, %s35
      %s29 = sphi 0, %s27
      %s30 = sphi 0, %s28
      %s31 = sphi 0, %s29
      %s32 = sphi 0, %s30
      %s48 = sphi 0, %s50
      %s51 = sphi 0, %s48
      %s52 = sphi 0, %s51
      %s68 = sphi 0, %s52
      %s76 = sphi 0, %s78
      %s79 = sphi 0, %s76
      %s80 = sphi 0, %s79
      %s96 = sphi 0, %s80
      %s100 = sphi 0, %s100
      %s102 = sphi 0, %s100
      %s103 = sphi 0, %s102
      %s117 = sphi 0, %s103
      %s121 = sphi 0, %s121
      %s123 = sphi 0, %s121
      %s124 = sphi 0, %s123
      %s138 = sphi 0, %s124
      %s144 = sphi 0, %s146
      %s147 = sphi 0, %s144
      %s148 = sphi 0, %s147
      %s164 = sphi 0, %s148
    $region4: #{tpu_custom_call.1} parent=1 // loop_header_branch
      %23 = sbr.rel (%p21) target = $region8
    $region5: #{tpu_custom_call.1} parent=1 // loop_body
      %s25 = ssub.s32 %s20, 1
      %s26 = ssub.s32 %s20, 2
      %s33 = sadd.s32 1, %s28
      %p34 = scmp.ge.s32.totalorder %s33, 1
      %s35 = scalar_select %p34, 0, %s33
      %s36 = sadd.s32 1, %s27
      %s37 = scalar_select %p34, %s36, %s27
      %p38 = scmp.ge.s32.totalorder %s37, 2
      %s39 = scalar_select %p38, 0, %s37
      %s40 = sadd.s32 %s27, %s28
      %p41 = scmp.lt.s32.totalorder %s40, 1
      %s42 = scalar_select %p41, %s40, 1
      %s43 = sadd.s32 %s39, %s35
      %p44 = scmp.lt.s32.totalorder %s43, 1
      %s45 = scalar_select %p44, %s43, 1
      %s46 = ssub.s32 %s42, %s45
      %p47 = scmp.eq.s32.totalorder %s46, 0
      %s49 = sadd.s32 %s48, 1
      %s50 = scalar_select %p47, %s48, %s49
      %p53 = pneg %p47
      %p54 = scmp.eq.s32.totalorder %s20, 1
      %p55 = por %p53, %p54
      %p56 = scmp.ne.s32.totalorder %s48, %s51
      %p57 = scmp.eq.s32.totalorder %s20, 0
      %p58 = por %p56, %p57
      %p59 = scmp.ne.s32.totalorder %s48, %s51
      %p60 = scmp.eq.s32.totalorder %s25, 1
      %p61 = por %p59, %p60
      %p62 = scmp.ne.s32.totalorder %s51, %s52
      %p63 = scmp.eq.s32.totalorder %s25, 0
      %p64 = por %p62, %p63
      %p65 = scmp.ne.s32.totalorder %s51, %s52
      %p66 = scmp.eq.s32.totalorder %s26, 1
      %p67 = por %p65, %p66
      %p69 = scmp.ne.s32.totalorder %s52, %s68
      %p70 = scmp.eq.s32.totalorder %s26, 0
      %p71 = por %p69, %p70
      %s72 = sadd.s32 %s27, %s28
      %s73 = sadd.s32 %s39, %s35
      %s74 = ssub.s32 %s72, %s73
      %p75 = scmp.eq.s32.totalorder %s74, 0
      %s77 = sadd.s32 %s76, 1
      %s78 = scalar_select %p75, %s76, %s77
      %p81 = pneg %p75
      %p82 = scmp.eq.s32.totalorder %s20, 1
      %p83 = por %p81, %p82
      %p84 = scmp.ne.s32.totalorder %s76, %s79
      %p85 = scmp.eq.s32.totalorder %s20, 0
      %p86 = por %p84, %p85
      %p87 = scmp.ne.s32.totalorder %s76, %s79
      %p88 = scmp.eq.s32.totalorder %s25, 1
      %p89 = por %p87, %p88
      %p90 = scmp.ne.s32.totalorder %s79, %s80
      %p91 = scmp.eq.s32.totalorder %s25, 0
      %p92 = por %p90, %p91
      %p93 = scmp.ne.s32.totalorder %s79, %s80
      %p94 = scmp.eq.s32.totalorder %s26, 1
      %p95 = por %p93, %p94
      %p97 = scmp.ne.s32.totalorder %s80, %s96
      %p98 = scmp.eq.s32.totalorder %s26, 0
      %p99 = por %p97, %p98
      %s101 = sadd.s32 %s100, 1
      %p104 = scmp.eq.s32.totalorder %s20, 1
      %p105 = scmp.ne.s32.totalorder %s100, %s102
      %p106 = scmp.eq.s32.totalorder %s20, 0
      %p107 = por %p105, %p106
      %p108 = scmp.ne.s32.totalorder %s100, %s102
      %p109 = scmp.eq.s32.totalorder %s25, 1
      %p110 = por %p108, %p109
      %p111 = scmp.ne.s32.totalorder %s102, %s103
      %p112 = scmp.eq.s32.totalorder %s25, 0
      %p113 = por %p111, %p112
      %p114 = scmp.ne.s32.totalorder %s102, %s103
      %p115 = scmp.eq.s32.totalorder %s26, 1
      %p116 = por %p114, %p115
      %p118 = scmp.ne.s32.totalorder %s103, %s117
      %p119 = scmp.eq.s32.totalorder %s26, 0
      %p120 = por %p118, %p119
      %s122 = sadd.s32 %s121, 1
      %p125 = scmp.eq.s32.totalorder %s20, 1
      %p126 = scmp.ne.s32.totalorder %s121, %s123
      %p127 = scmp.eq.s32.totalorder %s20, 0
      %p128 = por %p126, %p127
      %p129 = scmp.ne.s32.totalorder %s121, %s123
      %p130 = scmp.eq.s32.totalorder %s25, 1
      %p131 = por %p129, %p130
      %p132 = scmp.ne.s32.totalorder %s123, %s124
      %p133 = scmp.eq.s32.totalorder %s25, 0
      %p134 = por %p132, %p133
      %p135 = scmp.ne.s32.totalorder %s123, %s124
      %p136 = scmp.eq.s32.totalorder %s26, 1
      %p137 = por %p135, %p136
      %p139 = scmp.ne.s32.totalorder %s124, %s138
      %p140 = scmp.eq.s32.totalorder %s26, 0
      %p141 = por %p139, %p140
      %s142 = ssub.s32 %s27, %s39
      %p143 = scmp.eq.s32.totalorder %s142, 0
      %s145 = sadd.s32 %s144, 1
      %s146 = scalar_select %p143, %s144, %s145
      %p149 = pneg %p143
      %p150 = scmp.eq.s32.totalorder %s20, 1
      %p151 = por %p149, %p150
      %p152 = scmp.ne.s32.totalorder %s144, %s147
      %p153 = scmp.eq.s32.totalorder %s20, 0
      %p154 = por %p152, %p153
      %p155 = scmp.ne.s32.totalorder %s144, %s147
      %p156 = scmp.eq.s32.totalorder %s25, 1
      %p157 = por %p155, %p156
      %p158 = scmp.ne.s32.totalorder %s147, %s148
      %p159 = scmp.eq.s32.totalorder %s25, 0
      %p160 = por %p158, %p159
      %p161 = scmp.ne.s32.totalorder %s147, %s148
      %p162 = scmp.eq.s32.totalorder %s26, 1
      %p163 = por %p161, %p162
      %p165 = scmp.ne.s32.totalorder %s148, %s164
      %p166 = scmp.eq.s32.totalorder %s26, 0
      %p167 = por %p165, %p166
      %p168 = scmp.le.s32.totalorder 1, %s20
      %p169 = scmp.lt.s32.totalorder %s20, 3
      %p170 = pnand %p168, %p169
      %p171 = pneg %p170
      // Predicated region
      $region9: #{tpu_custom_call.1} parent=5 // pred_check
        _
      $region10: #{tpu_custom_call.1} parent=5 // pred_check_branch
        %173 = sbr.rel (%p170) target = $region12
      $region11: #{tpu_custom_call.1} parent=5 // pred_region
        %s174 = ssub.s32 %s20, 1
        // Predicated region
        $region13: #{tpu_custom_call.1} parent=11 // pred_check
          %p175 = pneg %p113
        $region14: #{tpu_custom_call.1} parent=11 // pred_check_branch
          %177 = sbr.rel (%p175) target = $region16
        $region15: #{tpu_custom_call.1} parent=11 // pred_region
          %s179 = ssub.s32 2048, 2048
          %180 = vsyncadd [#allocation8], %s179
          %s181 = sshll.u32 [#allocation9], 4
          %s182 = int_to_ptr.vmem [resolvable:$true] %s181
          %187 = dma.hbm_to_vmem [thread:$0]  %s2, 2048, %s182, [#allocation8], 128, 128, 8
        $region16: #{tpu_custom_call.1} parent=11 // pred_fallthru
          _
        // Predicated region
        $region17: #{tpu_custom_call.1} parent=11 // pred_check
          %p188 = pneg %p134
        $region18: #{tpu_custom_call.1} parent=11 // pred_check_branch
          %190 = sbr.rel (%p188) target = $region20
        $region19: #{tpu_custom_call.1} parent=11 // pred_region
          %s192 = ssub.s32 2048, 2048
          %193 = vsyncadd [#allocation11], %s192
          %s194 = sshll.u32 [#allocation10], 4
          %s195 = int_to_ptr.vmem [resolvable:$true] %s194
          %200 = dma.hbm_to_vmem [thread:$0]  %s3, 2048, %s195, [#allocation11], 128, 128, 8
        $region20: #{tpu_custom_call.1} parent=11 // pred_fallthru
          _
      $region12: #{tpu_custom_call.1} parent=5 // pred_fallthru
        _
      %p201 = scmp.lt.s32.totalorder %s20, 2
      // Predicated region
      $region21: #{tpu_custom_call.1} parent=5 // pred_check
        %p202 = pneg %p201
      $region22: #{tpu_custom_call.1} parent=5 // pred_check_branch
        %204 = sbr.rel (%p202) target = $region24
      $region23: #{tpu_custom_call.1} parent=5 // pred_region
        // Predicated region
        $region25: #{tpu_custom_call.1} parent=23 // pred_check
          %p205 = pneg %p58
        $region26: #{tpu_custom_call.1} parent=23 // pred_check_branch
          %207 = sbr.rel (%p205) target = $region28
        $region27: #{tpu_custom_call.1} parent=23 // pred_region
          %s208 = sand.u32 %s48, 1
          %s209 = scalar_lea.sflag [#allocation5], %s208
          %s210 = sand.u32 %s48, 1
          %s211 = smul.addr %s210, 8
          %s212 = scalar_lea.vmem [#allocation4], %s211
          %s213 = sadd.s32 %s27, %s28
          %p214 = scmp.lt.s32.totalorder %s213, 1
          %s215 = scalar_select %p214, %s213, 1
          %s217 = ssub.s32 128, 128
          %218 = vsyncadd %s209, %s217
          %s219 = smul.addr %s215, 128
          %s220 = scalar_lea.hbm %s0, %s219
          %s222 = sshll.u32 %s212, 4
          %s223 = int_to_ptr.vmem [resolvable:$true] %s222
          %225 = dma.hbm_to_vmem [thread:$0]  %s220, 128, %s223, %s209
        $region28: #{tpu_custom_call.1} parent=23 // pred_fallthru
          _
        // Predicated region
        $region29: #{tpu_custom_call.1} parent=23 // pred_check
          %p226 = pneg %p86
        $region30: #{tpu_custom_call.1} parent=23 // pred_check_branch
          %228 = sbr.rel (%p226) target = $region32
        $region31: #{tpu_custom_call.1} parent=23 // pred_region
          %s229 = sand.u32 %s20, 1
          %s230 = scalar_lea.sflag [#allocation8], %s229
          %s231 = sand.u32 %s76, 1
          %s232 = smul.addr %s231, 8
          %s233 = scalar_lea.vmem [#allocation7], %s232
          %s234 = sadd.s32 %s27, %s28
          %s236 = ssub.s32 128, 128
          %237 = vsyncadd %s230, %s236
          %s238 = smul.addr %s234, 128
          %s239 = scalar_lea.hbm %s1, %s238
          %s241 = sshll.u32 %s233, 4
          %s242 = int_to_ptr.vmem [resolvable:$true] %s241
          %244 = dma.hbm_to_vmem [thread:$0]  %s239, 128, %s242, %s230
        $region32: #{tpu_custom_call.1} parent=23 // pred_fallthru
          _
      $region24: #{tpu_custom_call.1} parent=5 // pred_fallthru
        _
      %p245 = scmp.le.s32.totalorder 1, %s20
      %p246 = scmp.lt.s32.totalorder %s20, 3
      %p247 = pnand %p245, %p246
      %p248 = pneg %p247
      // Predicated region
      $region33: #{tpu_custom_call.1} parent=5 // pred_check
        _
      $region34: #{tpu_custom_call.1} parent=5 // pred_check_branch
        %250 = sbr.rel (%p247) target = $region36
      $region35: #{tpu_custom_call.1} parent=5 // pred_region
        %s251 = ssub.s32 %s20, 1
        %s252 = sand.u32 %s51, 1
        %s253 = scalar_lea.sflag [#allocation5], %s252
        %s254 = sand.u32 %s51, 1
        %s255 = smul.addr %s254, 8
        %s256 = scalar_lea.vmem [#allocation4], %s255
        // Predicated region
        $region37: #{tpu_custom_call.1} parent=35 // pred_check
          %p257 = pneg %p64
        $region38: #{tpu_custom_call.1} parent=35 // pred_check_branch
          %259 = sbr.rel (%p257) target = $region40
        $region39: #{tpu_custom_call.1} parent=35 // pred_region
          %260 = dma.done %s253, 128
        $region40: #{tpu_custom_call.1} parent=35 // pred_fallthru
          _
        %s261 = sand.u32 %s25, 1
        %s262 = scalar_lea.sflag [#allocation8], %s261
        %s263 = sand.u32 %s79, 1
        %s264 = smul.addr %s263, 8
        %s265 = scalar_lea.vmem [#allocation7], %s264
        // Predicated region
        $region41: #{tpu_custom_call.1} parent=35 // pred_check
          %p266 = pneg %p92
        $region42: #{tpu_custom_call.1} parent=35 // pred_check_branch
          %268 = sbr.rel (%p266) target = $region44
        $region43: #{tpu_custom_call.1} parent=35 // pred_region
          %269 = dma.done %s262, 128
        $region44: #{tpu_custom_call.1} parent=35 // pred_fallthru
          _
        // Predicated region
        $region45: #{tpu_custom_call.1} parent=35 // pred_check
          %p270 = pneg %p113
        $region46: #{tpu_custom_call.1} parent=35 // pred_check_branch
          %272 = sbr.rel (%p270) target = $region48
        $region47: #{tpu_custom_call.1} parent=35 // pred_region
          %273 = dma.done [#allocation8], 2048
        $region48: #{tpu_custom_call.1} parent=35 // pred_fallthru
          _
        // Predicated region
        $region49: #{tpu_custom_call.1} parent=35 // pred_check
          %p274 = pneg %p134
        $region50: #{tpu_custom_call.1} parent=35 // pred_check_branch
          %276 = sbr.rel (%p274) target = $region52
        $region51: #{tpu_custom_call.1} parent=35 // pred_region
          %277 = dma.done [#allocation11], 2048
        $region52: #{tpu_custom_call.1} parent=35 // pred_fallthru
          _
        %s278 = sand.u32 %s51, 1
        %s279 = scalar_lea.sflag [#allocation5], %s278
        %s280 = sand.u32 %s51, 1
        %s281 = smul.addr %s280, 8
        %s282 = scalar_lea.vmem [#allocation4], %s281
        %p283 = pneg %p64
        %p284 = pneg %p61
        %s285 = sand.u32 %s25, 1
        %s286 = scalar_lea.sflag [#allocation8], %s285
        %s287 = sand.u32 %s79, 1
        %s288 = smul.addr %s287, 8
        %s289 = scalar_lea.vmem [#allocation7], %s288
        %p290 = pneg %p92
        %p291 = pneg %p89
        %p292 = pneg %p113
        %p293 = pneg %p110
        %p294 = pneg %p134
        %p295 = pneg %p131
        %p296 = pneg %p160
        %p297 = pneg %p157
        %s298 = sand.u32 %s147, 1
        %s299 = scalar_lea.sflag [#allocation6], %s298
        %s300 = sand.u32 %s147, 1
        %s301 = scalar_lea.vmem [#allocation12], %s300
        %s302 = sadd.s32 %s29, %s30
        %p303 = scmp.lt.s32.totalorder %s302, 1
        %s304 = scalar_select %p303, %s302, 1
        %s305 = sadd.s32 %s29, %s30
        %p306 = scmp.eq.s32.totalorder %s30, 0
        // Predicated region
        $region53: #{tpu_custom_call.1} parent=35 // pred_check
          %p307 = pneg %p306
        $region54: #{tpu_custom_call.1} parent=35 // pred_check_branch
          %309 = sbr.rel (%p307) target = $region56
        $region55: #{tpu_custom_call.1} parent=35 // pred_region
          %vm310 = vcmask 130048
          %311 = vst.msk [vmem:[#allocation2] sm:$0xff] %vm310, 0.0
          %312 = vst.msk [vmem:[#allocation3] sm:$0xff] %vm310, 0.0
        $region56: #{tpu_custom_call.1} parent=35 // pred_fallthru
          _
        %v313 = vld [vmem:[%s256] sm:$0xff]
        %v314 = vld [vmem:[%s265] sm:$0xff]
        %315 = vmax.xlane.f32.xlu0 %v313
        %v316 = vpop.xlane.xlu0 %315
        %v317 = vsub.f32 %v313, %v316
        %v318 = vmul.f32 %v317, 1.442695
        %v319 = vpow.pop %v318
        %v320 = vld [vmem:[#allocation9] sm:$0xff]
        %v321 = vld [vmem:[#allocation9 + $0x8] sm:$0xff]
        %v322 = vld [vmem:[#allocation9 + $0x10] sm:$0xff]
        %v323 = vld [vmem:[#allocation9 + $0x18] sm:$0xff]
        %v324 = vld [vmem:[#allocation9 + $0x20] sm:$0xff]
        %v325 = vld [vmem:[#allocation9 + $0x28] sm:$0xff]
        %v326 = vld [vmem:[#allocation9 + $0x30] sm:$0xff]
        %v327 = vld [vmem:[#allocation9 + $0x38] sm:$0xff]
        %v328 = vld [vmem:[#allocation9 + $0x40] sm:$0xff]
        %v329 = vld [vmem:[#allocation9 + $0x48] sm:$0xff]
        %v330 = vld [vmem:[#allocation9 + $0x50] sm:$0xff]
        %v331 = vld [vmem:[#allocation9 + $0x58] sm:$0xff]
        %v332 = vld [vmem:[#allocation9 + $0x60] sm:$0xff]
        %v333 = vld [vmem:[#allocation9 + $0x68] sm:$0xff]
        %v334 = vld [vmem:[#allocation9 + $0x70] sm:$0xff]
        %v335 = vld [vmem:[#allocation9 + $0x78] sm:$0xff]
        %336 = vmatprep.subr.mxu0 0.0
        %337 = vmatpush1.msra.mxu0 %v335
        %338 = vmatprep.subr.mxu0 0.0
        %339 = vmatpush1.msra.mxu0 %v334
        %340 = vmatprep.subr.mxu0 0.0
        %341 = vmatpush1.msra.mxu0 %v333
        %342 = vmatprep.subr.mxu0 0.0
        %343 = vmatpush1.msra.mxu0 %v332
        %344 = vmatprep.subr.mxu0 0.0
        %345 = vmatpush1.msra.mxu0 %v331
        %346 = vmatprep.subr.mxu0 0.0
        %347 = vmatpush1.msra.mxu0 %v330
        %348 = vmatprep.subr.mxu0 0.0
        %349 = vmatpush1.msra.mxu0 %v329
        %350 = vmatprep.subr.mxu0 0.0
        %351 = vmatpush1.msra.mxu0 %v328
        %352 = vmatprep.subr.mxu0 0.0
        %353 = vmatpush1.msra.mxu0 %v327
        %354 = vmatprep.subr.mxu0 0.0
        %355 = vmatpush1.msra.mxu0 %v326
        %356 = vmatprep.subr.mxu0 0.0
        %357 = vmatpush1.msra.mxu0 %v325
        %358 = vmatprep.subr.mxu0 0.0
        %359 = vmatpush1.msra.mxu0 %v324
        %360 = vmatprep.subr.mxu0 0.0
        %361 = vmatpush1.msra.mxu0 %v323
        %362 = vmatprep.subr.mxu0 0.0
        %363 = vmatpush1.msra.mxu0 %v322
        %364 = vmatprep.subr.mxu0 0.0
        %365 = vmatpush1.msra.mxu0 %v321
        %366 = vmatprep.subr.mxu0 0.0
        %367 = vmatpush1.msra.mxu0 %v320
        %368 = vmatprep.subr.mxu0 0.0
        %369 = vmatpush2.msra.mxu0 0.0
        %370 = vmatprep.subr.mxu0 0.0
        %371 = vmatpush2.msra.mxu0 0.0
        %372 = vmatprep.subr.mxu0 0.0
        %373 = vmatpush2.msra.mxu0 0.0
        %374 = vmatprep.subr.mxu0 0.0
        %375 = vmatpush2.msra.mxu0 0.0
        %376 = vmatprep.subr.mxu0 0.0
        %377 = vmatpush2.msra.mxu0 0.0
        %378 = vmatprep.subr.mxu0 0.0
        %379 = vmatpush2.msra.mxu0 0.0
        %380 = vmatprep.subr.mxu0 0.0
        %381 = vmatpush2.msra.mxu0 0.0
        %382 = vmatprep.subr.mxu0 0.0
        %383 = vmatpush2.msra.mxu0 0.0
        %384 = vmatprep.subr.mxu0 0.0
        %385 = vmatpush2.msra.mxu0 0.0
        %386 = vmatprep.subr.mxu0 0.0
        %387 = vmatpush2.msra.mxu0 0.0
        %388 = vmatprep.subr.mxu0 0.0
        %389 = vmatpush2.msra.mxu0 0.0
        %390 = vmatprep.subr.mxu0 0.0
        %391 = vmatpush2.msra.mxu0 0.0
        %392 = vmatprep.subr.mxu0 0.0
        %393 = vmatpush2.msra.mxu0 0.0
        %394 = vmatprep.subr.mxu0 0.0
        %395 = vmatpush2.msra.mxu0 0.0
        %396 = vmatprep.subr.mxu0 0.0
        %397 = vmatpush2.msra.mxu0 0.0
        %398 = vmatprep.subr.mxu0 0.0
        %399 = vmatpush2.msra.mxu0 0.0
        %400 = vmatprep.mubr.f32.mxu0 0.0
        %401 = vmatmul.mubr.f32.gmra.mxu0 %v319
        %v402 = vpop.f32.mrf.mxu0
        %v403 = vadd.f32 0.0, %v402
        %v404 = vpop.f32.mrf.mxu0
        %405 = vdwg.mxu0
        %v406 = vld [vmem:[#allocation10] sm:$0xff]
        %v407 = vld [vmem:[#allocation10 + $0x8] sm:$0xff]
        %v408 = vld [vmem:[#allocation10 + $0x10] sm:$0xff]
        %v409 = vld [vmem:[#allocation10 + $0x18] sm:$0xff]
        %v410 = vld [vmem:[#allocation10 + $0x20] sm:$0xff]
        %v411 = vld [vmem:[#allocation10 + $0x28] sm:$0xff]
        %v412 = vld [vmem:[#allocation10 + $0x30] sm:$0xff]
        %v413 = vld [vmem:[#allocation10 + $0x38] sm:$0xff]
        %v414 = vld [vmem:[#allocation10 + $0x40] sm:$0xff]
        %v415 = vld [vmem:[#allocation10 + $0x48] sm:$0xff]
        %v416 = vld [vmem:[#allocation10 + $0x50] sm:$0xff]
        %v417 = vld [vmem:[#allocation10 + $0x58] sm:$0xff]
        %v418 = vld [vmem:[#allocation10 + $0x60] sm:$0xff]
        %v419 = vld [vmem:[#allocation10 + $0x68] sm:$0xff]
        %v420 = vld [vmem:[#allocation10 + $0x70] sm:$0xff]
        %v421 = vld [vmem:[#allocation10 + $0x78] sm:$0xff]
        %422 = vmatprep.subr.mxu0 0.0
        %423 = vmatpush1.msra.mxu0 %v421
        %424 = vmatprep.subr.mxu0 0.0
        %425 = vmatpush1.msra.mxu0 %v420
        %426 = vmatprep.subr.mxu0 0.0
        %427 = vmatpush1.msra.mxu0 %v419
        %428 = vmatprep.subr.mxu0 0.0
        %429 = vmatpush1.msra.mxu0 %v418
        %430 = vmatprep.subr.mxu0 0.0
        %431 = vmatpush1.msra.mxu0 %v417
        %432 = vmatprep.subr.mxu0 0.0
        %433 = vmatpush1.msra.mxu0 %v416
        %434 = vmatprep.subr.mxu0 0.0
        %435 = vmatpush1.msra.mxu0 %v415
        %436 = vmatprep.subr.mxu0 0.0
        %437 = vmatpush1.msra.mxu0 %v414
        %438 = vmatprep.subr.mxu0 0.0
        %439 = vmatpush1.msra.mxu0 %v413
        %440 = vmatprep.subr.mxu0 0.0
        %441 = vmatpush1.msra.mxu0 %v412
        %442 = vmatprep.subr.mxu0 0.0
        %443 = vmatpush1.msra.mxu0 %v411
        %444 = vmatprep.subr.mxu0 0.0
        %445 = vmatpush1.msra.mxu0 %v410
        %446 = vmatprep.subr.mxu0 0.0
        %447 = vmatpush1.msra.mxu0 %v409
        %448 = vmatprep.subr.mxu0 0.0
        %449 = vmatpush1.msra.mxu0 %v408
        %450 = vmatprep.subr.mxu0 0.0
        %451 = vmatpush1.msra.mxu0 %v407
        %452 = vmatprep.subr.mxu0 0.0
        %453 = vmatpush1.msra.mxu0 %v406
        %454 = vmatprep.subr.mxu0 0.0
        %455 = vmatpush2.msra.mxu0 0.0
        %456 = vmatprep.subr.mxu0 0.0
        %457 = vmatpush2.msra.mxu0 0.0
        %458 = vmatprep.subr.mxu0 0.0
        %459 = vmatpush2.msra.mxu0 0.0
        %460 = vmatprep.subr.mxu0 0.0
        %461 = vmatpush2.msra.mxu0 0.0
        %462 = vmatprep.subr.mxu0 0.0
        %463 = vmatpush2.msra.mxu0 0.0
        %464 = vmatprep.subr.mxu0 0.0
        %465 = vmatpush2.msra.mxu0 0.0
        %466 = vmatprep.subr.mxu0 0.0
        %467 = vmatpush2.msra.mxu0 0.0
        %468 = vmatprep.subr.mxu0 0.0
        %469 = vmatpush2.msra.mxu0 0.0
        %470 = vmatprep.subr.mxu0 0.0
        %471 = vmatpush2.msra.mxu0 0.0
        %472 = vmatprep.subr.mxu0 0.0
        %473 = vmatpush2.msra.mxu0 0.0
        %474 = vmatprep.subr.mxu0 0.0
        %475 = vmatpush2.msra.mxu0 0.0
        %476 = vmatprep.subr.mxu0 0.0
        %477 = vmatpush2.msra.mxu0 0.0
        %478 = vmatprep.subr.mxu0 0.0
        %479 = vmatpush2.msra.mxu0 0.0
        %480 = vmatprep.subr.mxu0 0.0
        %481 = vmatpush2.msra.mxu0 0.0
        %482 = vmatprep.subr.mxu0 0.0
        %483 = vmatpush2.msra.mxu0 0.0
        %484 = vmatprep.subr.mxu0 0.0
        %485 = vmatpush2.msra.mxu0 0.0
        %486 = vmatprep.mubr.f32.mxu0 0.0
        %487 = vmatmul.mubr.f32.gmra.mxu0 %v319
        %v488 = vpop.f32.mrf.mxu0
        %v489 = vadd.f32 0.0, %v488
        %v490 = vpop.f32.mrf.mxu0
        %491 = vdwg.mxu0
        %v492 = vrcp.pop %v403
        %v493 = vmul.f32 %v489, %v492
        %vm494 = vcmp.eq.s32.totalorder %v314, 3
        %vm495 = vcmp.ge.s32.totalorder %v314, 0
        %vm496 = vcmp.ne.s32.totalorder %v314, 3
        %vm497 = vmand %vm495, %vm496
        %v498 = vld [vmem:[#allocation3] sm:$0xff]
        %v499 = vsub.f32 1.0, %v493
        %v500 = vmul.f32 %v499, %v499
        %v501 = vsel %vm494, %v500, 0.0
        %v502 = vadd.f32 %v498, %v501
        %vm503 = vcmask 130048
        %504 = vst.msk [vmem:[#allocation3] sm:$0xff] %vm503, %v502
        %v505 = vld [vmem:[#allocation2] sm:$0xff]
        %v506 = vmul.f32 %v493, %v493
        %v507 = vsel %vm497, %v506, 0.0
        %v508 = vadd.f32 %v505, %v507
        %509 = vst.msk [vmem:[#allocation2] sm:$0xff] %vm503, %v508
        // Predicated region
        $region57: #{tpu_custom_call.1} parent=35 // pred_check
          %p510 = pneg %p306
        $region58: #{tpu_custom_call.1} parent=35 // pred_check_branch
          %512 = sbr.rel (%p510) target = $region60
        $region59: #{tpu_custom_call.1} parent=35 // pred_region
          %v513 = vlaneseq
          %v514 = vand.u32 %v513, 127
          %vm515 = vcmp.eq.s32.totalorder %v514, 0
          %v516 = vld [vmem:[#allocation2] sm:$0xff]
          %v517 = vsel %vm503, %v516, 0.0
          %518 = vadd.xlane.f32.xlu0 %v517
          %v519 = vpop.xlane.xlu0 %518
          %v520 = vrot.slane %v519, 4
          %v521 = vadd.f32 %v519, %v520
          %v522 = vrot.slane %v521, 2
          %v523 = vadd.f32 %v521, %v522
          %v524 = vrot.slane %v523, 1
          %v525 = vadd.f32 %v523, %v524
          %s526 = vtos %v525
          %v527 = vld [vmem:[#allocation3] sm:$0xff]
          %v528 = vsel %vm503, %v527, 0.0
          %529 = vadd.xlane.f32.xlu0 %v528
          %v530 = vpop.xlane.xlu0 %529
          %v531 = vrot.slane %v530, 4
          %v532 = vadd.f32 %v530, %v531
          %v533 = vrot.slane %v532, 2
          %v534 = vadd.f32 %v532, %v533
          %v535 = vrot.slane %v534, 1
          %v536 = vadd.f32 %v534, %v535
          %s537 = vtos %v536
          %v538 = vstv %s526
          %v539 = vstv %s537
          %v540 = vsel %vm515, %v538, %v539
          %vm541 = vcmask 8192
          %542 = vst.msk [vmem:[%s301] sm:$0x1] %vm541, %v540
        $region60: #{tpu_custom_call.1} parent=35 // pred_fallthru
          _
        %s543 = sand.u32 %s147, 1
        %s544 = scalar_lea.sflag [#allocation6], %s543
        %s545 = sand.u32 %s147, 1
        %s546 = scalar_lea.vmem [#allocation12], %s545
        // Predicated region
        $region61: #{tpu_custom_call.1} parent=35 // pred_check
          %p547 = pneg %p157
        $region62: #{tpu_custom_call.1} parent=35 // pred_check_branch
          %549 = sbr.rel (%p547) target = $region64
        $region63: #{tpu_custom_call.1} parent=35 // pred_region
          %s551 = ssub.s32 16, 16
          %552 = vsyncadd %s544, %s551
          %s553 = smul.addr %s29, 16
          %s554 = scalar_lea.hbm %s4, %s553
          %s556 = sshll.u32 %s546, 4
          %s557 = int_to_ptr.vmem [resolvable:$true] %s556
          %559 = dma.vmem_to_hbm [thread:$0]  %s557, 16, %s554, %s544
        $region64: #{tpu_custom_call.1} parent=35 // pred_fallthru
          _
      $region36: #{tpu_custom_call.1} parent=5 // pred_fallthru
        _
      %p560 = scmp.le.s32.totalorder 2, %s20
      // Predicated region
      $region65: #{tpu_custom_call.1} parent=5 // pred_check
        %p561 = pneg %p560
      $region66: #{tpu_custom_call.1} parent=5 // pred_check_branch
        %563 = sbr.rel (%p561) target = $region68
      $region67: #{tpu_custom_call.1} parent=5 // pred_region
        %s564 = ssub.s32 %s20, 2
        // Predicated region
        $region69: #{tpu_custom_call.1} parent=67 // pred_check
          %p565 = pneg %p163
        $region70: #{tpu_custom_call.1} parent=67 // pred_check_branch
          %567 = sbr.rel (%p565) target = $region72
        $region71: #{tpu_custom_call.1} parent=67 // pred_region
          %s568 = sand.u32 %s148, 1
          %s569 = scalar_lea.sflag [#allocation6], %s568
          %s570 = sand.u32 %s148, 1
          %s571 = scalar_lea.vmem [#allocation12], %s570
          %572 = dma.done %s569, 16
        $region72: #{tpu_custom_call.1} parent=67 // pred_fallthru
          _
      $region68: #{tpu_custom_call.1} parent=5 // pred_fallthru
        _
    $region6: #{tpu_custom_call.1} parent=1 // loop_footer
      %s24 = sadd.s32 1, %s20
    $region7: #{tpu_custom_call.1} parent=1 // loop_footer_branch
      %19 = sbr.rel target = $region3
    $region8: #{tpu_custom_call.1} parent=1 // loop_exit
      _
    %573 = vsyncpa [#allocation5], 1
    %s574 = scalar_lea.sflag [#allocation5], 1
    %575 = vsyncpa %s574, 1
    %576 = vsyncpa [#allocation8], 1
    %s577 = scalar_lea.sflag [#allocation8], 1
    %578 = vsyncpa %s577, 1
    %579 = vsyncpa [#allocation11], 1
    %580 = vsyncpa [#allocation6], 1
    %s581 = scalar_lea.sflag [#allocation6], 1
    %582 = vsyncpa %s581, 1

</llo_original>
